<compile_context>
chip_gen: v7x
topology: tpu7x:2x2x1
jax: 0.10.0
libtpu: 0.0.40
codegen_flags: <defaults>
</compile_context>

<pallas_src>
import functools

import jax
import jax.numpy as jnp
from jax import lax
from jax.experimental import pallas as pl
from jax.experimental.pallas import tpu as pltpu


def _double_nll_kernel(s_ref, t_ref, out_ref, *, scale):
    """One batch tile: s_ref [TB, Cp] f32 (log-probs), t_ref [TB, 1] int32 targets.

    Accumulates scale * sum_b s[b, t[b]] into the resident SMEM scalar out_ref.
    Padded rows carry target = -1 and padded columns have lane-id >= C, so neither
    ever matches the one-hot compare and both contribute exactly 0.
    """
    step = pl.program_id(0)

    @pl.when(step == 0)
    def _init():
        out_ref[0, 0] = jnp.float32(0.0)

    s = s_ref[...]                                          # [TB, Cp] f32
    t = t_ref[...]                                          # [TB, 1]  int32
    col = lax.broadcasted_iota(jnp.int32, s.shape, 1)       # lane ids along class dim
    picked = jnp.where(col == t, s, jnp.float32(0.0))       # one-hot gather of s[b, t[b]]
    out_ref[0, 0] += scale * jnp.sum(picked)


def double_nll_loss(scores, targets, *, weight=1.0, row_tile=256):
    """scores = (s0 [B,C], s1 [B,C]) log-probabilities; targets = (t0 [B], t1 [B]) int."""
    s0, s1 = scores
    t0, t1 = targets
    B, C = s0.shape

    # Fuse the two passes into one lane-dense slab.
    s = jnp.concatenate([s0, s1], axis=0).astype(jnp.float32)    # [2B, C]
    t = jnp.concatenate([t0, t1], axis=0).astype(jnp.int32)      # [2B]

    # Lane-dense class dim: pad to a multiple of 128 (padded cols never selected).
    c_pad = ((C + 127) // 128) * 128
    if c_pad != C:
        s = jnp.pad(s, ((0, 0), (0, c_pad - C)))

    # Batch tiling: tile is a multiple of 8 sublanes; pad rows with target = -1.
    rows = 2 * B
    tb = min(((row_tile + 7) // 8) * 8, ((rows + 7) // 8) * 8)
    rows_pad = ((rows + tb - 1) // tb) * tb
    if rows_pad != rows:
        s = jnp.pad(s, ((0, rows_pad - rows), (0, 0)))
        t = jnp.pad(t, ((0, rows_pad - rows),), constant_values=-1)
    t2 = t.reshape(-1, 1)                                        # [rows_pad, 1]

    grid = (rows_pad // tb,)
    # weight * (l0 + l1) / 2 = -weight/(2B) * sum_b picked  (folded compile-time constant)
    scale = -float(weight) / (2.0 * float(B))

    kernel = functools.partial(_double_nll_kernel, scale=scale)
    out = pl.pallas_call(
        kernel,
        out_shape=jax.ShapeDtypeStruct((1, 1), jnp.float32),
        grid=grid,
        in_specs=[
            pl.BlockSpec((tb, c_pad), lambda i: (i, 0)),
            pl.BlockSpec((tb, 1), lambda i: (i, 0)),
        ],
        out_specs=pl.BlockSpec((1, 1), lambda i: (0, 0),
                               memory_space=pltpu.MemorySpace.SMEM),
        compiler_params=pltpu.CompilerParams(
            dimension_semantics=("arbitrary",)),  # output accumulated across the grid
    )(s, t2)
    return out[0, 0]


def _reference(scores, targets, weight):
    """Pure-JAX mirror of the PyTorch module (NLLLoss on log-probs, mean reduction)."""
    def nll(s, t):
        return -jnp.mean(s[jnp.arange(s.shape[0]), t])
    return weight * (nll(scores[0], targets[0]) + nll(scores[1], targets[1])) / 2.0


if __name__ == "__main__":
    key = jax.random.PRNGKey(0)
    k1, k2, k3, k4 = jax.random.split(key, 4)

    B, C = 8, 10                      # MNIST-like: batch 8, 10 classes
    weight = 0.5

    # nn.NLLLoss consumes log-probabilities, so build log-softmax scores.
    scores0 = jax.nn.log_softmax(jax.random.normal(k1, (B, C), dtype=jnp.float32), axis=-1)
    scores1 = jax.nn.log_softmax(jax.random.normal(k2, (B, C), dtype=jnp.float32), axis=-1)
    targets0 = jax.random.randint(k3, (B,), 0, C, dtype=jnp.int32)
    targets1 = jax.random.randint(k4, (B,), 0, C, dtype=jnp.int32)

    out = double_nll_loss((scores0, scores1), (targets0, targets1), weight=weight)
    out = jax.block_until_ready(out)

    ref = _reference((scores0, scores1), (targets0, targets1), weight)
    assert jnp.allclose(out, ref, rtol=1e-5, atol=1e-6), (out, ref)

    print("KERNEL_OK")
</pallas_src>

<mosaic_0001>
module attributes {stable_mosaic.version = 11 : i64} {
  func.func @_double_nll_kernel(%arg0: i32, %arg1: memref<16x128xf32, #tpu.memory_space<vmem>>, %arg2: memref<16x1xi32, #tpu.memory_space<vmem>>, %arg3: memref<1x1xf32, #tpu.memory_space<smem>>) attributes {dimension_semantics = [#tpu.dimension_semantics<arbitrary>], iteration_bounds = array<i64: 1>, scalar_prefetch = 0 : i64, scratch_operands = 0 : i64, tpu.core_type = #tpu.core_type<tc>, window_params = [{transform_indices = @transform_0, window_bounds = array<i64: 16, 128>}, {transform_indices = @transform_1, window_bounds = array<i64: 16, 1>}, {transform_indices = @transform_2, window_bounds = array<i64: 1, 1>}]} {
    %c0_i32 = arith.constant 0 : i32
    %0 = arith.cmpi eq, %arg0, %c0_i32 : i32
    %1 = arith.extui %0 : i1 to i32
    %c0_i32_0 = arith.constant 0 : i32
    %2 = arith.cmpi ne, %1, %c0_i32_0 : i32
    scf.if %2 {
      %cst_10 = arith.constant 0.000000e+00 : f32
      %c0_11 = arith.constant 0 : index
      %c0_12 = arith.constant 0 : index
      %18 = memref.load %arg3[%c0_11, %c0_12] : memref<1x1xf32, #tpu.memory_space<smem>>
      memref.store %cst_10, %arg3[%c0_11, %c0_12] : memref<1x1xf32, #tpu.memory_space<smem>>
    } else {
    }
    %c0 = arith.constant 0 : index
    %c0_1 = arith.constant 0 : index
    %3 = vector.load %arg1[%c0, %c0_1] : memref<16x128xf32, #tpu.memory_space<vmem>>, vector<16x128xf32>
    %c0_2 = arith.constant 0 : index
    %c0_3 = arith.constant 0 : index
    %4 = vector.load %arg2[%c0_2, %c0_3] : memref<16x1xi32, #tpu.memory_space<vmem>>, vector<16x1xi32>
    %5 = tpu.iota {dimensions = array<i32: 1>} : vector<16x128xi32>
    %6 = vector.broadcast %4 : vector<16x1xi32> to vector<16x128xi32>
    %7 = arith.cmpi eq, %5, %6 : vector<16x128xi32>
    %cst = arith.constant 0.000000e+00 : f32
    %8 = vector.broadcast %cst : f32 to vector<16x128xf32>
    %9 = arith.select %7, %3, %8 : vector<16x128xi1>, vector<16x128xf32>
    %c0_4 = arith.constant 0 : index
    %c0_5 = arith.constant 0 : index
    %10 = memref.load %arg3[%c0_4, %c0_5] : memref<1x1xf32, #tpu.memory_space<smem>>
    %11 = vector.shape_cast %9 : vector<16x128xf32> to vector<1x16x128xf32>
    %cst_6 = arith.constant dense<0.000000e+00> : vector<1xf32>
    %12 = vector.multi_reduction <add>, %11, %cst_6 [1, 2] : vector<1x16x128xf32> to vector<1xf32>
    %13 = vector.shape_cast %12 : vector<1xf32> to vector<1x1x1xf32>
    %14 = vector.extract %13[0, 0, 0] : f32 from vector<1x1x1xf32>
    %cst_7 = arith.constant -3.125000e-02 : f32
    %15 = arith.mulf %cst_7, %14 : f32
    %16 = arith.addf %10, %15 : f32
    %c0_8 = arith.constant 0 : index
    %c0_9 = arith.constant 0 : index
    %17 = memref.load %arg3[%c0_8, %c0_9] : memref<1x1xf32, #tpu.memory_space<smem>>
    memref.store %16, %arg3[%c0_8, %c0_9] : memref<1x1xf32, #tpu.memory_space<smem>>
    return
  }
  func.func @transform_0(%arg0: i32) -> (i32, i32) {
    %c0_i32 = arith.constant 0 : i32
    %c0_i32_0 = arith.constant 0 : i32
    return %arg0, %c0_i32 : i32, i32
  }
  func.func @transform_1(%arg0: i32) -> (i32, i32) {
    %c0_i32 = arith.constant 0 : i32
    %c0_i32_0 = arith.constant 0 : i32
    return %arg0, %c0_i32 : i32, i32
  }
  func.func @transform_2(%arg0: i32) -> (i32, i32) {
    %c0_i32 = arith.constant 0 : i32
    %c0_i32_0 = arith.constant 0 : i32
    %c0_i32_1 = arith.constant 0 : i32
    return %c0_i32, %c0_i32_0 : i32, i32
  }
}

</mosaic_0001>

<llo_original>
// kernel: tpu_custom_call.1
$region0: #{tpu_custom_call.1}
  #allocation0 [shape = 'u32[]', space=smem, size = 0x4, offset = 0x4, fixed_abs, tag = 'smem constant byte address 0x4 - core index']
  #allocation1 [shape = 'u32[144,128]{1,0:T(1,128)}', space=vmem, size = 0x12000, scoped, tag = 'internal scratch']
  %s0 = inlined_call_operand.vmem [shape: f32[16,128], index: 0, kind: input, shape index: {}]
  %s1 = inlined_call_operand.vmem [shape: s32[16,1], index: 1, kind: input, shape index: {}]
  %s2 = inlined_call_operand.hbm [shape: f32[1,1], index: 2, kind: output, shape index: {}]
  %s3 = sld [smem:[#allocation0]]
  $region22: #{tpu_custom_call.1} parent=0
    _
  %s5 = ssub.s32 1, %s3
  %s6 = scalar_select 0, %s5, %s3
  $region1: #{tpu_custom_call.1} parent=0
    #allocation2 [shape = 'u8[512]{0}', space=smem, size = 0x200, scoped, tag = 'output window, operand 0, single buffered']
    #allocation3 [shape = 's32[1]{0}', space=sflag, size = 0x4, scoped, tag = 'scoped memory for tpu_custom_call.1']
    %7 = vsyncpa [#allocation3], 0
    // Predicated region
    $region2: #{tpu_custom_call.1} parent=1 // pred_check
      _
    $region3: #{tpu_custom_call.1} parent=1 // pred_check_branch
      %9 = sbr.rel (0) target = $region5
    $region4: #{tpu_custom_call.1} parent=1 // pred_region
      _
    $region5: #{tpu_custom_call.1} parent=1 // pred_fallthru
      _
    // Predicated region
    $region6: #{tpu_custom_call.1} parent=1 // pred_check
      _
    $region7: #{tpu_custom_call.1} parent=1 // pred_check_branch
      %11 = sbr.rel (0) target = $region9
    $region8: #{tpu_custom_call.1} parent=1 // pred_region
      _
    $region9: #{tpu_custom_call.1} parent=1 // pred_fallthru
      _
    %p12 = scmp.eq.s32.totalorder 0, 0
    // Predicated region
    $region10: #{tpu_custom_call.1} parent=1 // pred_check
      %p13 = pneg %p12
    $region11: #{tpu_custom_call.1} parent=1 // pred_check_branch
      %15 = sbr.rel (%p13) target = $region13
    $region12: #{tpu_custom_call.1} parent=1 // pred_region
      %s16 = scalar_lea.smem [#allocation2], 0
      %17 = sst [smem:[%s16]] 0.0
    $region13: #{tpu_custom_call.1} parent=1 // pred_fallthru
      _
    %v18 = vld [vmem:[%s0] sm:$0xff]
    %v19 = vld [vmem:[%s0 + $0x8] sm:$0xff]
    %v20 = vld [vmem:[%s1] sm:$0xff]
    %v21 = vld [vmem:[%s1 + $0x8] sm:$0xff]
    %v22 = vlaneseq
    %v23 = vand.u32 %v22, 127
    %24 = vset.pattern.permute.xlu0 0
    %25 = vperm.xlu0 %24, %v20
    %v26 = vpop.permute.xlu0 %25
    %27 = vset.pattern.permute.xlu0 0
    %28 = vperm.xlu0 %27, %v21
    %v29 = vpop.permute.xlu0 %28
    %vm30 = vcmp.eq.s32.totalorder %v23, %v26
    %vm31 = vcmp.eq.s32.totalorder %v23, %v29
    %v32 = vsel %vm30, %v18, 0.0
    %v33 = vsel %vm31, %v19, 0.0
    %s34 = sld [smem:[#allocation2]]
    %v35 = vadd.f32 %v32, %v33
    %36 = vadd.xlane.f32.xlu0 %v35
    %v37 = vpop.xlane.xlu0 %36
    %v38 = vrot.slane %v37, 4
    %v39 = vadd.f32 %v37, %v38
    %v40 = vrot.slane %v39, 2
    %v41 = vadd.f32 %v39, %v40
    %v42 = vrot.slane %v41, 1
    %v43 = vadd.f32 %v41, %v42
    %s44 = vtos %v43
    %s45 = smul.f32 %s44, -0.03125
    %s46 = sadd.f32 %s34, %s45
    %s47 = scalar_lea.smem [#allocation2], 0
    %48 = sst [smem:[%s47]] %s46
    // Predicated region
    $region14: #{tpu_custom_call.1} parent=1 // pred_check
      _
    $region15: #{tpu_custom_call.1} parent=1 // pred_check_branch
      %50 = sbr.rel (0) target = $region17
    $region16: #{tpu_custom_call.1} parent=1 // pred_region
      %s52 = ssub.s32 16, 16
      %53 = vsyncadd [#allocation3], %s52
      %56 = dma.smem_to_hbm [#allocation2], 16, %s2, [#allocation3]
    $region17: #{tpu_custom_call.1} parent=1 // pred_fallthru
      _
    // Predicated region
    $region18: #{tpu_custom_call.1} parent=1 // pred_check
      _
    $region19: #{tpu_custom_call.1} parent=1 // pred_check_branch
      %58 = sbr.rel (0) target = $region21
    $region20: #{tpu_custom_call.1} parent=1 // pred_region
      %59 = dma.done [#allocation3], 16
    $region21: #{tpu_custom_call.1} parent=1 // pred_fallthru
      _
    %60 = sfence
    %61 = vsyncpa [#allocation3], 1

</llo_original>
